<compile_context>
chip_gen: v5e
topology: v5e:2x2
jax: 0.10.0
libtpu: 0.0.40
codegen_flags: <defaults>
</compile_context>

<pallas_src>
import jax
import jax.numpy as jnp
from jax.experimental import pallas as pl
from jax.experimental.pallas import tpu as pltpu


_TILE_VMEM_BUDGET = 16 * 1024 * 1024        # budget for the double-buffered x/out tiles
_KRON_WEIGHT_LIMIT_BYTES = 4 * 1024 * 1024  # past this the block-diag trick stops paying
_MAX_KRON_CONTRACTION = 256                 # v6e/v7x MXU contraction depth
_MIN_ROWS_PER_GRID_STEP = 512               # only split the grid when each step gets this much


def fcn_kernel(x_ref, w_ref, b_ref, out_ref):
    # (tile_r, Lin) @ (Lin, Lout) on the MXU, f32 accumulation.
    y = jnp.dot(x_ref[...], w_ref[...], preferred_element_type=jnp.float32)
    y = y + b_ref[...]                      # folded linear+BN bias, broadcast (1, Lout)
    out_ref[...] = jnp.maximum(y, 0.0).astype(out_ref.dtype)   # single lane-dense store


def fold_batchnorm(w, b, gamma, beta, running_mean, running_var, eps=1e-5):
    """Fold eval-mode BatchNorm1d into the linear weight / bias."""
    scale = gamma / jnp.sqrt(running_var + eps)                 # (cout,)
    return w * scale[None, :], scale * (b - running_mean) + beta


def prepare_fcn_params(w, b, gamma, beta, running_mean, running_var, *, t,
                       eps=1e-5, compute_dtype=jnp.bfloat16, rows_per_slab=1,
                       use_block_diag=True):
    """One-time parameter prep (hoisted out of the per-forward hot path).

    w is (cin, cout), i.e. the transpose of PyTorch's nn.Linear.weight (x @ w layout).
    Returns a dict that can be reused across many fcn_forward calls.
    """
    cin, cout = w.shape
    w_fold, bias = fold_batchnorm(w, b, gamma, beta, running_mean, running_var, eps)

    rows_per_slab = max(1, int(rows_per_slab))
    t_eff = t * rows_per_slab
    in_size = jnp.dtype(compute_dtype).itemsize
    kron_bytes = (t_eff * cin) * (t_eff * cout) * in_size
    use_kron = (use_block_diag
                and t_eff * cin <= _MAX_KRON_CONTRACTION
                and kron_bytes <= _KRON_WEIGHT_LIMIT_BYTES)

    if use_kron:
        # Block-diagonal weight: the matmul directly produces the output in its
        # final lane-dense (rows, T*cout) layout (one unmasked store per tile).
        w_big = jnp.kron(jnp.eye(t_eff, dtype=w_fold.dtype), w_fold).astype(compute_dtype)
        b_big = jnp.tile(bias, (t_eff,)).reshape(1, t_eff * cout).astype(jnp.float32)
    else:
        # Fallback: flat (kk*t, cin) @ (cin, cout) with the original-size weight.
        rows_per_slab = 1
        w_big = w_fold.astype(compute_dtype)
        b_big = bias.reshape(1, cout).astype(jnp.float32)

    return dict(w_big=w_big, b_big=b_big, t=t, cin=cin, cout=cout,
                rows_per_slab=rows_per_slab, use_kron=use_kron,
                compute_dtype=compute_dtype)


def _pick_tile_rows(rows, pipelined_bytes_per_row, *, sublane):
    """Bytes-driven tile size; single grid step unless rows are large or VMEM-bound."""
    max_rows = (_TILE_VMEM_BUDGET // max(pipelined_bytes_per_row, 1)) // sublane * sublane
    max_rows = max(sublane, max_rows)
    if rows <= max_rows and rows < 2 * _MIN_ROWS_PER_GRID_STEP:
        return rows                          # one block: the grid is a sequential loop on v5e/v6e
    cap = min(max_rows, rows)
    if rows >= 2 * _MIN_ROWS_PER_GRID_STEP:
        cap = min(cap, -(-rows // 2))        # >= 2 steps so both v7x TensorCores get work
    # Prefer a divisor of `rows` (no padding); prefer multiples of 128 (MXU cadence).
    for step in (128, sublane):
        tr = cap - cap % step
        while tr >= step:
            if rows % tr == 0:
                return tr
            tr -= step
    return max(sublane, cap - cap % sublane)  # no friendly divisor: caller pads rows


def fcn_forward(x, params, *, out_dtype=jnp.float32, tile_rows=None):
    """FCN forward using params prepared once by prepare_fcn_params."""
    kk, t, cin = x.shape
    if t != params["t"] or cin != params["cin"]:
        raise ValueError("x shape does not match the prepared parameters")
    cout = params["cout"]
    cdt = params["compute_dtype"]

    if params["use_kron"]:
        p = params["rows_per_slab"]
        kk_pad = (-kk) % p
        xp = x if kk_pad == 0 else jnp.concatenate(
            [x, jnp.zeros((kk_pad, t, cin), x.dtype)], axis=0)
        rows = (kk + kk_pad) // p
        lin, lout = p * t * cin, p * t * cout
        x2 = xp.reshape(rows, lin).astype(cdt)
    else:
        rows = kk * t
        lin, lout = cin, cout
        x2 = x.reshape(rows, lin).astype(cdt)

    in_size = jnp.dtype(cdt).itemsize
    out_size = jnp.dtype(out_dtype).itemsize
    sublane = 16 if in_size == 2 else 8                         # bf16 packs (16,128)
    pipelined_bpr = 2 * (lin * in_size + lout * out_size)       # double-buffered x + out tiles

    if tile_rows is None:
        tile_r = _pick_tile_rows(rows, pipelined_bpr, sublane=sublane)
    else:
        tile_r = max(1, min(int(tile_rows), rows))              # validate, never assert
        if tile_r != rows:
            tile_r = min(rows, max(sublane, tile_r - tile_r % sublane))

    grid_r = pl.cdiv(rows, tile_r)
    rows_pad = grid_r * tile_r
    if rows_pad != rows:                                        # ragged rows: pad, slice after
        x2 = jnp.concatenate([x2, jnp.zeros((rows_pad - rows, lin), x2.dtype)], axis=0)

    w2, b2 = params["w_big"], params["b_big"]
    vmem_needed = (tile_r * pipelined_bpr
                   + 2 * (w2.size * w2.dtype.itemsize + b2.size * b2.dtype.itemsize))
    vmem_limit = int(min(max(vmem_needed + (8 << 20), 32 << 20), 48 << 20))

    out2 = pl.pallas_call(
        fcn_kernel,
        out_shape=jax.ShapeDtypeStruct((rows_pad, lout), out_dtype),
        grid_spec=pltpu.PrefetchScalarGridSpec(
            num_scalar_prefetch=0,
            grid=(grid_r,),
            in_specs=[
                pl.BlockSpec((tile_r, lin), lambda i: (i, 0)),
                # Grid-invariant weight / bias (constant index_map) stay resident in
                # VMEM.  (pipeline_mode=pl.Buffered(1) would halve their footprint as
                # T grows; unnecessary at these sizes.)
                pl.BlockSpec((lin, lout), lambda i: (0, 0)),
                pl.BlockSpec((1, lout), lambda i: (0, 0)),
            ],
            out_specs=pl.BlockSpec((tile_r, lout), lambda i: (i, 0)),
        ),
        compiler_params=pltpu.CompilerParams(
            dimension_semantics=("parallel",),   # shards multi-step grids across v7x cores
            vmem_limit_bytes=vmem_limit,
        ),
    )(x2, w2, b2)

    out2 = out2[:rows]                           # drop row padding (if any)
    return out2.reshape(-1, t, cout)[:kk]        # back to (kk, t, cout)


def fcn_reference(x, w, b, gamma, beta, running_mean, running_var, eps=1e-5):
    kk, t, cin = x.shape
    y = x.reshape(kk * t, cin) @ w + b
    y = (y - running_mean) / jnp.sqrt(running_var + eps) * gamma + beta
    return jnp.maximum(y, 0.0).reshape(kk, t, -1)


if __name__ == "__main__":
    # Small shapes consistent with the module: cin=16, cout=32, t=8 points, kk=64 rows.
    K, T, CIN, COUT = 64, 8, 16, 32

    key = jax.random.PRNGKey(0)
    kx, kw, kb, kg, kbe, krm, krv = jax.random.split(key, 7)

    x = jax.random.normal(kx, (K, T, CIN), dtype=jnp.float32)

    # nn.Linear(cin, cout) parameters (weight stored transposed for x @ W).
    w_lin = jax.random.normal(kw, (CIN, COUT), dtype=jnp.float32) * 0.1
    b_lin = jax.random.normal(kb, (COUT,), dtype=jnp.float32) * 0.1

    # BatchNorm1d(cout) parameters (inference-mode fold).
    gamma = 1.0 + 0.1 * jax.random.normal(kg, (COUT,), dtype=jnp.float32)
    beta = 0.1 * jax.random.normal(kbe, (COUT,), dtype=jnp.float32)
    run_mean = 0.1 * jax.random.normal(krm, (COUT,), dtype=jnp.float32)
    run_var = jnp.abs(1.0 + 0.1 * jax.random.normal(krv, (COUT,), dtype=jnp.float32))

    ref = fcn_reference(x, w_lin, b_lin, gamma, beta, run_mean, run_var)

    # 1) f32 compute / f32 output (tight correctness check).  Params prepared ONCE.
    params_f32 = prepare_fcn_params(w_lin, b_lin, gamma, beta, run_mean, run_var,
                                    t=T, compute_dtype=jnp.float32)
    out = jax.block_until_ready(fcn_forward(x, params_f32))
    assert out.shape == (K, T, COUT)
    assert jnp.allclose(out, ref, atol=1e-4, rtol=1e-4)

    # 2) default bf16 compute (halves x / weight HBM streams; f32 accumulate), f32 output.
    params_bf16 = prepare_fcn_params(w_lin, b_lin, gamma, beta, run_mean, run_var, t=T)
    out_bf16 = jax.block_until_ready(fcn_forward(x, params_bf16))
    assert out_bf16.shape == (K, T, COUT)
    assert jnp.allclose(out_bf16, ref, atol=5e-2, rtol=5e-2)

    # 3) bf16 output as well (the output is the dominant HBM stream at large K).
    out_bf16o = jax.block_until_ready(fcn_forward(x, params_bf16, out_dtype=jnp.bfloat16))
    assert out_bf16o.dtype == jnp.bfloat16
    assert jnp.allclose(out_bf16o.astype(jnp.float32), ref, atol=1e-1, rtol=1e-1)

    # 4) v6e/v7x MXU packing: 2 kk-rows per slab row -> 256-deep contraction.
    params_pack2 = prepare_fcn_params(w_lin, b_lin, gamma, beta, run_mean, run_var,
                                      t=T, compute_dtype=jnp.float32, rows_per_slab=2)
    out_p2 = jax.block_until_ready(fcn_forward(x, params_pack2))
    assert jnp.allclose(out_p2, ref, atol=1e-4, rtol=1e-4)

    # 5) flat fallback path (what very large T*cin would use automatically).
    params_flat = prepare_fcn_params(w_lin, b_lin, gamma, beta, run_mean, run_var,
                                     t=T, compute_dtype=jnp.float32, use_block_diag=False)
    out_flat = jax.block_until_ready(fcn_forward(x, params_flat))
    assert jnp.allclose(out_flat, ref, atol=1e-4, rtol=1e-4)

    print("KERNEL_OK")
</pallas_src>

<mosaic_0001>
module attributes {stable_mosaic.version = 11 : i64} {
  func.func @fcn_kernel(%arg0: i32, %arg1: memref<64x128xf32, #tpu.memory_space<vmem>>, %arg2: memref<128x256xf32, #tpu.memory_space<vmem>>, %arg3: memref<1x256xf32, #tpu.memory_space<vmem>>, %arg4: memref<64x256xf32, #tpu.memory_space<vmem>>) attributes {dimension_semantics = [#tpu.dimension_semantics<parallel>], iteration_bounds = array<i64: 1>, scalar_prefetch = 0 : i64, scratch_operands = 0 : i64, tpu.core_type = #tpu.core_type<tc>, window_params = [{transform_indices = @transform_0, window_bounds = array<i64: 64, 128>}, {pipeline_mode = #tpu.pipeline_mode<synchronous>, transform_indices = @transform_1, window_bounds = array<i64: 128, 256>}, {pipeline_mode = #tpu.pipeline_mode<synchronous>, transform_indices = @transform_2, window_bounds = array<i64: 1, 256>}, {transform_indices = @transform_3, window_bounds = array<i64: 64, 256>}]} {
    %c0 = arith.constant 0 : index
    %c0_0 = arith.constant 0 : index
    %0 = vector.load %arg1[%c0, %c0_0] : memref<64x128xf32, #tpu.memory_space<vmem>>, vector<64x128xf32>
    %c0_1 = arith.constant 0 : index
    %c0_2 = arith.constant 0 : index
    %1 = vector.load %arg2[%c0_1, %c0_2] : memref<128x256xf32, #tpu.memory_space<vmem>>, vector<128x256xf32>
    %cst = arith.constant dense<0.000000e+00> : vector<64x256xf32>
    %2 = tpu.matmul %0, %1, %cst {dimension_numbers = #tpu.dot_dimension_numbers<[1], [0], [0], [1], [0, 0, 1, 1], [], []>} : vector<64x128xf32>, vector<128x256xf32>, vector<64x256xf32> -> vector<64x256xf32>
    %c0_3 = arith.constant 0 : index
    %c0_4 = arith.constant 0 : index
    %3 = vector.load %arg3[%c0_3, %c0_4] : memref<1x256xf32, #tpu.memory_space<vmem>>, vector<1x256xf32>
    %4 = vector.broadcast %3 : vector<1x256xf32> to vector<64x256xf32>
    %5 = arith.addf %2, %4 : vector<64x256xf32>
    %cst_5 = arith.constant 0.000000e+00 : f32
    %6 = vector.broadcast %cst_5 : f32 to vector<64x256xf32>
    %7 = arith.maximumf %5, %6 : vector<64x256xf32>
    %c0_6 = arith.constant 0 : index
    %c0_7 = arith.constant 0 : index
    %8 = vector.load %arg4[%c0_6, %c0_7] : memref<64x256xf32, #tpu.memory_space<vmem>>, vector<64x256xf32>
    tpu.vector_store %arg4[%c0_6, %c0_7], %7 {strides = array<i32>} : memref<64x256xf32, #tpu.memory_space<vmem>>, vector<64x256xf32>,
    return
  }
  func.func @transform_0(%arg0: i32) -> (i32, i32) {
    %c0_i32 = arith.constant 0 : i32
    %c0_i32_0 = arith.constant 0 : i32
    return %arg0, %c0_i32 : i32, i32
  }
  func.func @transform_1(%arg0: i32) -> (i32, i32) {
    %c0_i32 = arith.constant 0 : i32
    %c0_i32_0 = arith.constant 0 : i32
    %c0_i32_1 = arith.constant 0 : i32
    return %c0_i32, %c0_i32_0 : i32, i32
  }
  func.func @transform_2(%arg0: i32) -> (i32, i32) {
    %c0_i32 = arith.constant 0 : i32
    %c0_i32_0 = arith.constant 0 : i32
    %c0_i32_1 = arith.constant 0 : i32
    return %c0_i32, %c0_i32_0 : i32, i32
  }
  func.func @transform_3(%arg0: i32) -> (i32, i32) {
    %c0_i32 = arith.constant 0 : i32
    %c0_i32_0 = arith.constant 0 : i32
    return %arg0, %c0_i32 : i32, i32
  }
}

</mosaic_0001>

<llo_original>
// kernel: tpu_custom_call.1
$region0: #{tpu_custom_call.1}
  #allocation0 [shape = 'u32[]', space=smem, size = 0x4, offset = 0x4, fixed_abs, tag = 'smem constant byte address 0x4 - core index']
  #allocation1 [shape = 'u32[72,128]{1,0:T(1,128)}', space=vmem, size = 0x9000, scoped, tag = 'internal scratch']
  %s0 = inlined_call_operand.hbm [shape: f32[64,128], index: 0, kind: input, shape index: {}]
  %s1 = inlined_call_operand.hbm [shape: f32[128,256], index: 1, kind: input, shape index: {}]
  %s2 = inlined_call_operand.hbm [shape: f32[1,256], index: 2, kind: input, shape index: {}]
  %s3 = inlined_call_operand.hbm [shape: f32[64,256], index: 3, kind: output, shape index: {}]
  %s4 = sld [smem:[#allocation0]]
  $region34: #{tpu_custom_call.1} parent=0
    _
  %s6 = ssub.s32 1, %s4
  %s7 = scalar_select 0, %s6, %s4
  $region1: #{tpu_custom_call.1} parent=0
    #allocation2 [shape = 'u8[32768]{0}', space=vmem, size = 0x8000, scoped, tag = 'input window, operand 0, single buffered']
    #allocation3 [shape = 's32[1]{0}', space=sflag, size = 0x4, scoped, tag = 'scoped memory for tpu_custom_call.1']
    #allocation4 [shape = 's32[1]{0}', space=sflag, size = 0x4, scoped, tag = 'scoped memory for tpu_custom_call.1']
    #allocation5 [shape = 'u8[131072]{0}', space=vmem, size = 0x20000, scoped, tag = 'input window, operand 1, single buffered']
    #allocation6 [shape = 's32[1]{0}', space=sflag, size = 0x4, scoped, tag = 'scoped memory for tpu_custom_call.1']
    #allocation7 [shape = 'u8[1024]{0}', space=vmem, size = 0x400, scoped, tag = 'input window, operand 2, single buffered']
    #allocation8 [shape = 'u8[65536]{0}', space=vmem, size = 0x10000, scoped, tag = 'output window, operand 0, single buffered']
    %8 = vsyncpa [#allocation3], 0
    %9 = vsyncpa [#allocation6], 0
    %10 = vsyncpa [#allocation4], 0
    // Predicated region
    $region2: #{tpu_custom_call.1} parent=1 // pred_check
      _
    $region3: #{tpu_custom_call.1} parent=1 // pred_check_branch
      %12 = sbr.rel (0) target = $region5
    $region4: #{tpu_custom_call.1} parent=1 // pred_region
      %14 = vsyncadd [#allocation3], 0
      %s15 = sshll.u32 %s0, 4
      %s16 = int_to_ptr.hbm [resolvable:$true] %s15
      %s17 = sshll.u32 [#allocation2], 4
      %s18 = int_to_ptr.vmem [resolvable:$true] %s17
      %23 = dma.hbm_to_vmem [thread:$0]  %s16, 1024, %s18, [#allocation3], 128, 128, 8
    $region5: #{tpu_custom_call.1} parent=1 // pred_fallthru
      _
    // Predicated region
    $region6: #{tpu_custom_call.1} parent=1 // pred_check
      _
    $region7: #{tpu_custom_call.1} parent=1 // pred_check_branch
      %25 = sbr.rel (0) target = $region9
    $region8: #{tpu_custom_call.1} parent=1 // pred_region
      %27 = vsyncadd [#allocation6], 0
      %s28 = sshll.u32 %s1, 4
      %s29 = int_to_ptr.hbm [resolvable:$true] %s28
      %s30 = sshll.u32 [#allocation5], 4
      %s31 = int_to_ptr.vmem [resolvable:$true] %s30
      %36 = dma.hbm_to_vmem [thread:$0]  %s29, 4096, %s31, [#allocation6], 256, 256, 16
    $region9: #{tpu_custom_call.1} parent=1 // pred_fallthru
      _
    // Predicated region
    $region10: #{tpu_custom_call.1} parent=1 // pred_check
      _
    $region11: #{tpu_custom_call.1} parent=1 // pred_check_branch
      %38 = sbr.rel (0) target = $region13
    $region12: #{tpu_custom_call.1} parent=1 // pred_region
      %40 = vsyncadd [#allocation6], 0
      %s42 = sshll.u32 %s2, 4
      %s43 = int_to_ptr.hbm [resolvable:$true] %s42
      %s44 = sshll.u32 [#allocation7], 4
      %s45 = int_to_ptr.vmem [resolvable:$true] %s44
      %47 = dma.hbm_to_vmem [thread:$0]  %s43, 32, %s45, [#allocation6]
    $region13: #{tpu_custom_call.1} parent=1 // pred_fallthru
      _
    // Predicated region
    $region14: #{tpu_custom_call.1} parent=1 // pred_check
      _
    $region15: #{tpu_custom_call.1} parent=1 // pred_check_branch
      %49 = sbr.rel (0) target = $region17
    $region16: #{tpu_custom_call.1} parent=1 // pred_region
      %51 = dma.done [#allocation3], 1024
    $region17: #{tpu_custom_call.1} parent=1 // pred_fallthru
      _
    // Predicated region
    $region18: #{tpu_custom_call.1} parent=1 // pred_check
      _
    $region19: #{tpu_custom_call.1} parent=1 // pred_check_branch
      %53 = sbr.rel (0) target = $region21
    $region20: #{tpu_custom_call.1} parent=1 // pred_region
      %55 = dma.done [#allocation6], 4096
    $region21: #{tpu_custom_call.1} parent=1 // pred_fallthru
      _
    // Predicated region
    $region22: #{tpu_custom_call.1} parent=1 // pred_check
      _
    $region23: #{tpu_custom_call.1} parent=1 // pred_check_branch
      %57 = sbr.rel (0) target = $region25
    $region24: #{tpu_custom_call.1} parent=1 // pred_region
      %59 = dma.done [#allocation6], 32
    $region25: #{tpu_custom_call.1} parent=1 // pred_fallthru
      _
    %v60 = vld [vmem:[#allocation2] sm:$0xff]
    %v61 = vld [vmem:[#allocation2 + $0x8] sm:$0xff]
    %v62 = vld [vmem:[#allocation2 + $0x10] sm:$0xff]
    %v63 = vld [vmem:[#allocation2 + $0x18] sm:$0xff]
    %v64 = vld [vmem:[#allocation2 + $0x20] sm:$0xff]
    %v65 = vld [vmem:[#allocation2 + $0x28] sm:$0xff]
    %v66 = vld [vmem:[#allocation2 + $0x30] sm:$0xff]
    %v67 = vld [vmem:[#allocation2 + $0x38] sm:$0xff]
    %v68 = vld [vmem:[#allocation5] sm:$0xff]
    %v69 = vld [vmem:[#allocation5 + $0x8] sm:$0xff]
    %v70 = vld [vmem:[#allocation5 + $0x10] sm:$0xff]
    %v71 = vld [vmem:[#allocation5 + $0x18] sm:$0xff]
    %v72 = vld [vmem:[#allocation5 + $0x20] sm:$0xff]
    %v73 = vld [vmem:[#allocation5 + $0x28] sm:$0xff]
    %v74 = vld [vmem:[#allocation5 + $0x30] sm:$0xff]
    %v75 = vld [vmem:[#allocation5 + $0x38] sm:$0xff]
    %v76 = vld [vmem:[#allocation5 + $0x40] sm:$0xff]
    %v77 = vld [vmem:[#allocation5 + $0x48] sm:$0xff]
    %v78 = vld [vmem:[#allocation5 + $0x50] sm:$0xff]
    %v79 = vld [vmem:[#allocation5 + $0x58] sm:$0xff]
    %v80 = vld [vmem:[#allocation5 + $0x60] sm:$0xff]
    %v81 = vld [vmem:[#allocation5 + $0x68] sm:$0xff]
    %v82 = vld [vmem:[#allocation5 + $0x70] sm:$0xff]
    %v83 = vld [vmem:[#allocation5 + $0x78] sm:$0xff]
    %v84 = vld [vmem:[#allocation5 + $0x80] sm:$0xff]
    %v85 = vld [vmem:[#allocation5 + $0x88] sm:$0xff]
    %v86 = vld [vmem:[#allocation5 + $0x90] sm:$0xff]
    %v87 = vld [vmem:[#allocation5 + $0x98] sm:$0xff]
    %v88 = vld [vmem:[#allocation5 + $0xa0] sm:$0xff]
    %v89 = vld [vmem:[#allocation5 + $0xa8] sm:$0xff]
    %v90 = vld [vmem:[#allocation5 + $0xb0] sm:$0xff]
    %v91 = vld [vmem:[#allocation5 + $0xb8] sm:$0xff]
    %v92 = vld [vmem:[#allocation5 + $0xc0] sm:$0xff]
    %v93 = vld [vmem:[#allocation5 + $0xc8] sm:$0xff]
    %v94 = vld [vmem:[#allocation5 + $0xd0] sm:$0xff]
    %v95 = vld [vmem:[#allocation5 + $0xd8] sm:$0xff]
    %v96 = vld [vmem:[#allocation5 + $0xe0] sm:$0xff]
    %v97 = vld [vmem:[#allocation5 + $0xe8] sm:$0xff]
    %v98 = vld [vmem:[#allocation5 + $0xf0] sm:$0xff]
    %v99 = vld [vmem:[#allocation5 + $0xf8] sm:$0xff]
    %v100 = vld [vmem:[#allocation7] sm:$0x3]
    %v102 = vperm.slane %v100, 0
    %v103 = vperm.slane %v100, 1
    %106 = vmatpush.msra.mxu0 %v98
    %107 = vmatpush.msra.mxu0 %v96
    %108 = vmatpush.msra.mxu0 %v94
    %109 = vmatpush.msra.mxu0 %v92
    %110 = vmatpush.msra.mxu0 %v90
    %111 = vmatpush.msra.mxu0 %v88
    %112 = vmatpush.msra.mxu0 %v86
    %113 = vmatpush.msra.mxu0 %v84
    %114 = vmatpush.msra.mxu0 %v82
    %115 = vmatpush.msra.mxu0 %v80
    %116 = vmatpush.msra.mxu0 %v78
    %117 = vmatpush.msra.mxu0 %v76
    %118 = vmatpush.msra.mxu0 %v74
    %119 = vmatpush.msra.mxu0 %v72
    %120 = vmatpush.msra.mxu0 %v70
    %121 = vmatpush.msra.mxu0 %v68
    %122 = vmatmul.f32.gmra.mxu0 %v60
    %v123 = vpop.f32.mrf.mxu0
    %v124 = vadd.f32 %v102, %v123
    %125 = vmatmul.f32.gmra.mxu0 %v61
    %v126 = vpop.f32.mrf.mxu0
    %v127 = vadd.f32 %v102, %v126
    %128 = vmatmul.f32.gmra.mxu0 %v62
    %v129 = vpop.f32.mrf.mxu0
    %v130 = vadd.f32 %v102, %v129
    %131 = vmatmul.f32.gmra.mxu0 %v63
    %v132 = vpop.f32.mrf.mxu0
    %v133 = vadd.f32 %v102, %v132
    %134 = vmatmul.f32.gmra.mxu0 %v64
    %v135 = vpop.f32.mrf.mxu0
    %v136 = vadd.f32 %v102, %v135
    %137 = vmatmul.f32.gmra.mxu0 %v65
    %v138 = vpop.f32.mrf.mxu0
    %v139 = vadd.f32 %v102, %v138
    %140 = vmatmul.f32.gmra.mxu0 %v66
    %v141 = vpop.f32.mrf.mxu0
    %v142 = vadd.f32 %v102, %v141
    %143 = vmatmul.f32.gmra.mxu0 %v67
    %v144 = vpop.f32.mrf.mxu0
    %v145 = vadd.f32 %v102, %v144
    %146 = vdwg.mxu0
    %147 = vmatpush.msra.mxu0 %v99
    %148 = vmatpush.msra.mxu0 %v97
    %149 = vmatpush.msra.mxu0 %v95
    %150 = vmatpush.msra.mxu0 %v93
    %151 = vmatpush.msra.mxu0 %v91
    %152 = vmatpush.msra.mxu0 %v89
    %153 = vmatpush.msra.mxu0 %v87
    %154 = vmatpush.msra.mxu0 %v85
    %155 = vmatpush.msra.mxu0 %v83
    %156 = vmatpush.msra.mxu0 %v81
    %157 = vmatpush.msra.mxu0 %v79
    %158 = vmatpush.msra.mxu0 %v77
    %159 = vmatpush.msra.mxu0 %v75
    %160 = vmatpush.msra.mxu0 %v73
    %161 = vmatpush.msra.mxu0 %v71
    %162 = vmatpush.msra.mxu0 %v69
    %163 = vmatmul.f32.gmra.mxu0 %v60
    %v164 = vpop.f32.mrf.mxu0
    %v165 = vadd.f32 %v103, %v164
    %166 = vmatmul.f32.gmra.mxu0 %v61
    %v167 = vpop.f32.mrf.mxu0
    %v168 = vadd.f32 %v103, %v167
    %169 = vmatmul.f32.gmra.mxu0 %v62
    %v170 = vpop.f32.mrf.mxu0
    %v171 = vadd.f32 %v103, %v170
    %172 = vmatmul.f32.gmra.mxu0 %v63
    %v173 = vpop.f32.mrf.mxu0
    %v174 = vadd.f32 %v103, %v173
    %175 = vmatmul.f32.gmra.mxu0 %v64
    %v176 = vpop.f32.mrf.mxu0
    %v177 = vadd.f32 %v103, %v176
    %178 = vmatmul.f32.gmra.mxu0 %v65
    %v179 = vpop.f32.mrf.mxu0
    %v180 = vadd.f32 %v103, %v179
    %181 = vmatmul.f32.gmra.mxu0 %v66
    %v182 = vpop.f32.mrf.mxu0
    %v183 = vadd.f32 %v103, %v182
    %184 = vmatmul.f32.gmra.mxu0 %v67
    %v185 = vpop.f32.mrf.mxu0
    %v186 = vadd.f32 %v103, %v185
    %187 = vdwg.mxu0
    %v188 = vmax.f32 %v124, 0.0
    %v189 = vmax.f32 %v165, 0.0
    %v190 = vmax.f32 %v127, 0.0
    %v191 = vmax.f32 %v168, 0.0
    %v192 = vmax.f32 %v130, 0.0
    %v193 = vmax.f32 %v171, 0.0
    %v194 = vmax.f32 %v133, 0.0
    %v195 = vmax.f32 %v174, 0.0
    %v196 = vmax.f32 %v136, 0.0
    %v197 = vmax.f32 %v177, 0.0
    %v198 = vmax.f32 %v139, 0.0
    %v199 = vmax.f32 %v180, 0.0
    %v200 = vmax.f32 %v142, 0.0
    %v201 = vmax.f32 %v183, 0.0
    %v202 = vmax.f32 %v145, 0.0
    %v203 = vmax.f32 %v186, 0.0
    %204 = vst [vmem:[#allocation8] sm:$0xff] %v188
    %205 = vst [vmem:[#allocation8 + $0x8] sm:$0xff] %v189
    %206 = vst [vmem:[#allocation8 + $0x10] sm:$0xff] %v190
    %207 = vst [vmem:[#allocation8 + $0x18] sm:$0xff] %v191
    %208 = vst [vmem:[#allocation8 + $0x20] sm:$0xff] %v192
    %209 = vst [vmem:[#allocation8 + $0x28] sm:$0xff] %v193
    %210 = vst [vmem:[#allocation8 + $0x30] sm:$0xff] %v194
    %211 = vst [vmem:[#allocation8 + $0x38] sm:$0xff] %v195
    %212 = vst [vmem:[#allocation8 + $0x40] sm:$0xff] %v196
    %213 = vst [vmem:[#allocation8 + $0x48] sm:$0xff] %v197
    %214 = vst [vmem:[#allocation8 + $0x50] sm:$0xff] %v198
    %215 = vst [vmem:[#allocation8 + $0x58] sm:$0xff] %v199
    %216 = vst [vmem:[#allocation8 + $0x60] sm:$0xff] %v200
    %217 = vst [vmem:[#allocation8 + $0x68] sm:$0xff] %v201
    %218 = vst [vmem:[#allocation8 + $0x70] sm:$0xff] %v202
    %219 = vst [vmem:[#allocation8 + $0x78] sm:$0xff] %v203
    // Predicated region
    $region26: #{tpu_custom_call.1} parent=1 // pred_check
      _
    $region27: #{tpu_custom_call.1} parent=1 // pred_check_branch
      %221 = sbr.rel (0) target = $region29
    $region28: #{tpu_custom_call.1} parent=1 // pred_region
      %223 = vsyncadd [#allocation4], 0
      %s224 = sshll.u32 [#allocation8], 4
      %s225 = int_to_ptr.vmem [resolvable:$true] %s224
      %s226 = sshll.u32 %s3, 4
      %s227 = int_to_ptr.hbm [resolvable:$true] %s226
      %232 = dma.vmem_to_hbm [thread:$0]  %s225, 2048, %s227, [#allocation4], 256, 256, 16
    $region29: #{tpu_custom_call.1} parent=1 // pred_fallthru
      _
    // Predicated region
    $region30: #{tpu_custom_call.1} parent=1 // pred_check
      _
    $region31: #{tpu_custom_call.1} parent=1 // pred_check_branch
      %234 = sbr.rel (0) target = $region33
    $region32: #{tpu_custom_call.1} parent=1 // pred_region
      %236 = dma.done [#allocation4], 2048
    $region33: #{tpu_custom_call.1} parent=1 // pred_fallthru
      _
    %237 = vsyncpa [#allocation3], 1
    %238 = vsyncpa [#allocation6], 1
    %239 = vsyncpa [#allocation4], 1

</llo_original>
